<compile_context>
chip_gen: v5e
topology: v5e:2x2
jax: 0.10.0
libtpu: 0.0.40
codegen_flags: <defaults>
</compile_context>

<pallas_src>
import jax
import jax.numpy as jnp
from jax.experimental import pallas as pl
from jax.experimental.pallas import tpu as pltpu


# ------------------------- problem sizes (small demo) -------------------------
B       = 2    # batch_size
G       = 3    # n_graph
V       = 8    # n_vertex
NFEAT   = 4
NHID    = 8
NHEADS  = 2
NCLASS  = 5    # unused by forward (out_att never called)
ALPHA   = 0.2  # LeakyReLU negative slope
NEG_INF = -9e15

C         = B * G * NHEADS   # 12 fused "cells" = (batch, graph, head), b-major order
OUT_LANES = 128              # lane-padded output width -> single unmasked vector store


# --------------------------------- kernel -------------------------------------
def gat_kernel(xnat_ref, xbd_ref, xcols_ref, adjb_ref,
               m1_ref, wa2_ref, wbd_ref, sege_ref, opack_ref, out_ref):
    """One invocation, everything VMEM resident, all cells batched along lanes.

    xnat_ref  : (V, C*NFEAT)       x per cell, natural (rows = vertices)
    xbd_ref   : (C*V, C*NFEAT)     block-diagonal x (rows = (cell, vertex))
    xcols_ref : (C*NFEAT, C*V)     = xbd.T (built in the wrapper, not in-kernel)
    adjb_ref  : (V, C*V)           adjacency tiled once per cell along lanes
    m1_ref    : (C*NFEAT, C*V)     folded W@a1, block-broadcast along j
    wa2_ref   : (V, C*NFEAT)       folded W@a2, replicated over rows
    wbd_ref   : (C*NFEAT, C*NHID)  block-diagonal W per cell
    sege_ref  : (C*V, C*NHID)      cell-segment indicator (softmax denominators)
    opack_ref : (C*NHID, 128)      O-projection + head-sum + (b,g)->lane scatter
    out_ref   : (V, 128)           lane-padded output slab (lanes 0..B*G-1 real)
    """
    f32 = jnp.float32

    # --- attention logits for ALL cells in one (V, C*V) lane-dense tile (2 MXU dots)
    w1 = jnp.dot(xnat_ref[...], m1_ref[...], preferred_element_type=f32)     # Wh1[c][i], bcast over j
    w2 = jnp.dot(wa2_ref[...], xcols_ref[...], preferred_element_type=f32)   # Wh2[c][j], lane oriented
    e = w1 + w2                                                              # e[i, c*V+j] = Wh1+Wh2
    e = jnp.where(e > 0, e, ALPHA * e)                                       # LeakyReLU(alpha)

    # --- exact adjacency masking + softmax over each cell's V lanes
    a = jnp.where(adjb_ref[...] > 0, e, NEG_INF)
    a = a - jnp.max(a, axis=-1, keepdims=True)     # per-row shift: softmax-invariant, keeps exp bounded
    p = jnp.exp(a)                                 # masked lanes -> exp(-9e15) == 0 exactly

    # --- att @ Wh for all cells: (p @ X_bd) @ W_bd ; denominators via segment matmul
    pw  = jnp.dot(p, xbd_ref[...], preferred_element_type=f32)               # (V, C*NFEAT)
    hp  = jnp.dot(pw, wbd_ref[...], preferred_element_type=f32)              # (V, C*NHID) unnormalized
    den = jnp.dot(p, sege_ref[...], preferred_element_type=f32)              # (V, C*NHID) softmax denom
    hp = hp / den                                                            # exact normalization
    hp = jnp.where(hp > 0, hp, jnp.exp(hp) - 1.0)                            # ELU (concat=True branch)

    # --- O-projection: applies O, sums heads, scatters (b,g) into lanes (1 MXU dot)
    out = jnp.dot(hp, opack_ref[...], preferred_element_type=f32)            # (V, 128)
    out_ref[...] = jnp.where(out > 0, out, ALPHA * out)                      # final LeakyReLU, 1 store


# ------------------------- parameter packing (load time) -----------------------
def pack_gat_params(W_all, a_all, O):
    """Build all parameter-side packed operands ONCE (outside the jitted forward)."""
    f32 = jnp.float32
    eye_c = jnp.eye(C, dtype=f32)

    # replicate per-(graph, head) params onto the fused cell axis c = (b*G + g)*NHEADS + h
    W_cell = jnp.broadcast_to(W_all[None], (B, G, NHEADS, NFEAT, NHID)).reshape(C, NFEAT, NHID)
    a1 = jnp.broadcast_to(a_all[None, :, :, :NHID, 0], (B, G, NHEADS, NHID)).reshape(C, NHID)
    a2 = jnp.broadcast_to(a_all[None, :, :, NHID:, 0], (B, G, NHEADS, NHID)).reshape(C, NHID)

    wa1 = jnp.einsum('cfd,cd->cf', W_cell, a1)            # fold W @ a1 -> (C, NFEAT)
    wa2 = jnp.einsum('cfd,cd->cf', W_cell, a2)            # fold W @ a2 -> (C, NFEAT)

    # M1[(c,f),(c',j)] = wa1[c,f] * (c == c')   (Wh1 per cell, constant along j)
    M1 = jnp.repeat(jnp.einsum('cf,ce->cfe', wa1, eye_c), V, axis=2).reshape(C * NFEAT, C * V)
    # wa2 replicated over the V rows (avoids an M=1 matmul and a sublane broadcast)
    wa2_rows = jnp.tile(wa2.reshape(1, C * NFEAT), (V, 1))
    # block-diagonal W: [(c,f),(c',d)] = W[c][f,d] * (c == c')
    W_bd = jnp.einsum('cfd,ce->cfed', W_cell, eye_c).reshape(C * NFEAT, C * NHID)
    # SegE[(c,j),(c',d)] = (c == c')  -> per-cell softmax denominator, replicated over NHID lanes
    SegE = jnp.kron(eye_c, jnp.ones((V, NHID), f32))
    # O-projection + head-sum + scatter each cell's contribution to output lane (b*G + g)
    O_cell = jnp.broadcast_to(O.reshape(G, NHEADS, NHID)[None], (B, G, NHEADS, NHID)).reshape(C, NHID)
    colsel = jax.nn.one_hot(jnp.arange(C) // NHEADS, OUT_LANES, dtype=f32)   # cell -> lane b*G+g
    Opack = jnp.einsum('cd,ck->cdk', O_cell, colsel).reshape(C * NHID, OUT_LANES)

    return M1, wa2_rows, W_bd, SegE, Opack


# -------------------------------- wrapper --------------------------------------
@jax.jit
def gat_forward(x, adj, M1, wa2_rows, W_bd, SegE, Opack):
    """x: (B,G,V,NFEAT), adj: (V,V), packed params from pack_gat_params -> (B,G,V,1)."""
    f32 = jnp.float32
    eye_c = jnp.eye(C, dtype=f32)

    # x-dependent packings (tiny, plain XLA, per call)
    x_cell = jnp.broadcast_to(x[:, :, None], (B, G, NHEADS, V, NFEAT)).reshape(C, V, NFEAT)
    Xnat = x_cell.transpose(1, 0, 2).reshape(V, C * NFEAT)                        # (V, C*F)
    X_bd = jnp.einsum('cvf,ce->cvef', x_cell, eye_c).reshape(C * V, C * NFEAT)    # block-diag
    X_cols = X_bd.T                                                               # (C*F, C*V)
    adj_big = jnp.tile(adj, (1, C))                                               # (V, C*V)

    vmem = pltpu.MemorySpace.VMEM
    out = pl.pallas_call(
        gat_kernel,
        out_shape=jax.ShapeDtypeStruct((V, OUT_LANES), f32),
        # No grid: one invocation, all operands VMEM resident (< 0.5 MiB total).
        in_specs=[pl.BlockSpec(memory_space=vmem)] * 9,
        out_specs=pl.BlockSpec(memory_space=vmem),
    )(Xnat, X_bd, X_cols, adj_big, M1, wa2_rows, W_bd, SegE, Opack)

    # lanes 0..B*G-1 hold (b*G + g); tiny XLA reshuffle outside the kernel
    return out[:, :B * G].T.reshape(B, G, V, 1)


# ----------------------------- pure-JAX reference ------------------------------
def gat_reference(x, adj, W_all, a_all, O):
    outs = []
    for hd in range(NHEADS):
        Wh = jnp.einsum('bgvf,gfh->bgvh', x, W_all[:, hd])                  # (B,G,V,H)
        a1 = a_all[:, hd, :NHID, 0]                                         # (G,H)
        a2 = a_all[:, hd, NHID:, 0]                                         # (G,H)
        Wh1 = jnp.einsum('bgvh,gh->bgv', Wh, a1)[..., :, None]              # (B,G,V,1)
        Wh2 = jnp.einsum('bgvh,gh->bgv', Wh, a2)[..., None, :]              # (B,G,1,V)
        e = Wh1 + Wh2
        e = jnp.where(e > 0, e, ALPHA * e)
        att = jnp.where(adj[None, None] > 0, e, NEG_INF)
        att = jax.nn.softmax(att, axis=-1)
        hp = jnp.einsum('bgvw,bgwh->bgvh', att, Wh)
        hp = jnp.where(hp > 0, hp, jnp.exp(hp) - 1.0)
        outs.append(hp)
    cat = jnp.concatenate(outs, axis=-1)                                    # (B,G,V,NHEADS*NHID)
    o = jnp.einsum('bvgh,ghe->bvge', cat.transpose(0, 2, 1, 3), O)
    o = o.transpose(0, 2, 1, 3)                                             # (B,G,V,1)
    return jnp.where(o > 0, o, ALPHA * o)


# ---------------------------------- main ----------------------------------------
if __name__ == "__main__":
    key = jax.random.PRNGKey(0)
    kx, kadj, kw, ka, ko = jax.random.split(key, 5)

    x = jax.random.normal(kx, (B, G, V, NFEAT), dtype=jnp.float32)

    # random symmetric binary adjacency with self-loops
    a_rand = jax.random.uniform(kadj, (V, V))
    adj = (a_rand + a_rand.T > 1.0).astype(jnp.float32)
    adj = jnp.maximum(adj, jnp.eye(V, dtype=jnp.float32))

    # deterministic "xavier-ish" parameter init (synthetic, not a checkpoint)
    W_all = 0.1 * jax.random.normal(kw, (G, NHEADS, NFEAT, NHID), dtype=jnp.float32)
    a_all = 0.1 * jax.random.normal(ka, (G, NHEADS, 2 * NHID, 1), dtype=jnp.float32)
    O = 0.1 * jax.random.normal(ko, (G, NHEADS * NHID, 1), dtype=jnp.float32)

    # parameter packing hoisted out of the per-call forward (done once here)
    packed = pack_gat_params(W_all, a_all, O)
    packed = jax.tree_util.tree_map(jax.block_until_ready, packed)

    out = gat_forward(x, adj, *packed)
    out = jax.block_until_ready(out)

    ref = gat_reference(x, adj, W_all, a_all, O)
    assert out.shape == (B, G, V, 1), out.shape
    # exact softmax normalization (no approx reciprocal) -> tolerance ~10x tighter
    # than the previous version; remaining diffs are float re-association only.
    assert jnp.allclose(out, ref, rtol=2e-3, atol=2e-4), float(jnp.max(jnp.abs(out - ref)))

    print("KERNEL_OK")
</pallas_src>

<mosaic_0001>
module attributes {stable_mosaic.version = 11 : i64} {
  func.func @gat_kernel(%arg0: memref<8x48xf32, #tpu.memory_space<vmem>>, %arg1: memref<96x48xf32, #tpu.memory_space<vmem>>, %arg2: memref<48x96xf32, #tpu.memory_space<vmem>>, %arg3: memref<8x96xf32, #tpu.memory_space<vmem>>, %arg4: memref<48x96xf32, #tpu.memory_space<vmem>>, %arg5: memref<8x48xf32, #tpu.memory_space<vmem>>, %arg6: memref<48x96xf32, #tpu.memory_space<vmem>>, %arg7: memref<96x96xf32, #tpu.memory_space<vmem>>, %arg8: memref<96x128xf32, #tpu.memory_space<vmem>>, %arg9: memref<8x128xf32, #tpu.memory_space<vmem>>) attributes {dimension_semantics = [], scalar_prefetch = 0 : i64, scratch_operands = 0 : i64, tpu.core_type = #tpu.core_type<tc>} {
    %c0 = arith.constant 0 : index
    %c0_0 = arith.constant 0 : index
    %0 = vector.load %arg0[%c0, %c0_0] : memref<8x48xf32, #tpu.memory_space<vmem>>, vector<8x48xf32>
    %c0_1 = arith.constant 0 : index
    %c0_2 = arith.constant 0 : index
    %1 = vector.load %arg4[%c0_1, %c0_2] : memref<48x96xf32, #tpu.memory_space<vmem>>, vector<48x96xf32>
    %cst = arith.constant dense<0.000000e+00> : vector<8x96xf32>
    %2 = tpu.matmul %0, %1, %cst {dimension_numbers = #tpu.dot_dimension_numbers<[1], [0], [0], [1], [0, 0, 1, 1], [], []>} : vector<8x48xf32>, vector<48x96xf32>, vector<8x96xf32> -> vector<8x96xf32>
    %c0_3 = arith.constant 0 : index
    %c0_4 = arith.constant 0 : index
    %3 = vector.load %arg5[%c0_3, %c0_4] : memref<8x48xf32, #tpu.memory_space<vmem>>, vector<8x48xf32>
    %c0_5 = arith.constant 0 : index
    %c0_6 = arith.constant 0 : index
    %4 = vector.load %arg2[%c0_5, %c0_6] : memref<48x96xf32, #tpu.memory_space<vmem>>, vector<48x96xf32>
    %cst_7 = arith.constant dense<0.000000e+00> : vector<8x96xf32>
    %5 = tpu.matmul %3, %4, %cst_7 {dimension_numbers = #tpu.dot_dimension_numbers<[1], [0], [0], [1], [0, 0, 1, 1], [], []>} : vector<8x48xf32>, vector<48x96xf32>, vector<8x96xf32> -> vector<8x96xf32>
    %6 = arith.addf %2, %5 : vector<8x96xf32>
    %cst_8 = arith.constant 0.000000e+00 : f32
    %7 = vector.broadcast %cst_8 : f32 to vector<8x96xf32>
    %8 = arith.cmpf ogt, %6, %7 : vector<8x96xf32>
    %cst_9 = arith.constant 2.000000e-01 : f32
    %9 = vector.broadcast %cst_9 : f32 to vector<8x96xf32>
    %10 = arith.mulf %9, %6 : vector<8x96xf32>
    %11 = arith.select %8, %6, %10 : vector<8x96xi1>, vector<8x96xf32>
    %c0_10 = arith.constant 0 : index
    %c0_11 = arith.constant 0 : index
    %12 = vector.load %arg3[%c0_10, %c0_11] : memref<8x96xf32, #tpu.memory_space<vmem>>, vector<8x96xf32>
    %cst_12 = arith.constant 0.000000e+00 : f32
    %13 = vector.broadcast %cst_12 : f32 to vector<8x96xf32>
    %14 = arith.cmpf ogt, %12, %13 : vector<8x96xf32>
    %cst_13 = arith.constant -9.000000e+15 : f32
    %15 = vector.broadcast %cst_13 : f32 to vector<8x96xf32>
    %16 = arith.select %14, %11, %15 : vector<8x96xi1>, vector<8x96xf32>
    %cst_14 = arith.constant dense<0xFF800000> : vector<8xf32>
    %17 = vector.multi_reduction <maximumf>, %16, %cst_14 [1] : vector<8x96xf32> to vector<8xf32>
    %18 = vector.shape_cast %17 : vector<8xf32> to vector<8x1xf32>
    %19 = vector.broadcast %18 : vector<8x1xf32> to vector<8x96xf32>
    %20 = arith.subf %16, %19 : vector<8x96xf32>
    %21 = math.exp %20 : vector<8x96xf32>
    %c0_15 = arith.constant 0 : index
    %c0_16 = arith.constant 0 : index
    %22 = vector.load %arg1[%c0_15, %c0_16] : memref<96x48xf32, #tpu.memory_space<vmem>>, vector<96x48xf32>
    %cst_17 = arith.constant dense<0.000000e+00> : vector<8x48xf32>
    %23 = tpu.matmul %21, %22, %cst_17 {dimension_numbers = #tpu.dot_dimension_numbers<[1], [0], [0], [1], [0, 0, 1, 1], [], []>} : vector<8x96xf32>, vector<96x48xf32>, vector<8x48xf32> -> vector<8x48xf32>
    %c0_18 = arith.constant 0 : index
    %c0_19 = arith.constant 0 : index
    %24 = vector.load %arg6[%c0_18, %c0_19] : memref<48x96xf32, #tpu.memory_space<vmem>>, vector<48x96xf32>
    %cst_20 = arith.constant dense<0.000000e+00> : vector<8x96xf32>
    %25 = tpu.matmul %23, %24, %cst_20 {dimension_numbers = #tpu.dot_dimension_numbers<[1], [0], [0], [1], [0, 0, 1, 1], [], []>} : vector<8x48xf32>, vector<48x96xf32>, vector<8x96xf32> -> vector<8x96xf32>
    %c0_21 = arith.constant 0 : index
    %c0_22 = arith.constant 0 : index
    %26 = vector.load %arg7[%c0_21, %c0_22] : memref<96x96xf32, #tpu.memory_space<vmem>>, vector<96x96xf32>
    %cst_23 = arith.constant dense<0.000000e+00> : vector<8x96xf32>
    %27 = tpu.matmul %21, %26, %cst_23 {dimension_numbers = #tpu.dot_dimension_numbers<[1], [0], [0], [1], [0, 0, 1, 1], [], []>} : vector<8x96xf32>, vector<96x96xf32>, vector<8x96xf32> -> vector<8x96xf32>
    %28 = arith.divf %25, %27 : vector<8x96xf32>
    %cst_24 = arith.constant 0.000000e+00 : f32
    %29 = vector.broadcast %cst_24 : f32 to vector<8x96xf32>
    %30 = arith.cmpf ogt, %28, %29 : vector<8x96xf32>
    %31 = math.exp %28 : vector<8x96xf32>
    %cst_25 = arith.constant 1.000000e+00 : f32
    %32 = vector.broadcast %cst_25 : f32 to vector<8x96xf32>
    %33 = arith.subf %31, %32 : vector<8x96xf32>
    %34 = arith.select %30, %28, %33 : vector<8x96xi1>, vector<8x96xf32>
    %c0_26 = arith.constant 0 : index
    %c0_27 = arith.constant 0 : index
    %35 = vector.load %arg8[%c0_26, %c0_27] : memref<96x128xf32, #tpu.memory_space<vmem>>, vector<96x128xf32>
    %cst_28 = arith.constant dense<0.000000e+00> : vector<8x128xf32>
    %36 = tpu.matmul %34, %35, %cst_28 {dimension_numbers = #tpu.dot_dimension_numbers<[1], [0], [0], [1], [0, 0, 1, 1], [], []>} : vector<8x96xf32>, vector<96x128xf32>, vector<8x128xf32> -> vector<8x128xf32>
    %cst_29 = arith.constant 0.000000e+00 : f32
    %37 = vector.broadcast %cst_29 : f32 to vector<8x128xf32>
    %38 = arith.cmpf ogt, %36, %37 : vector<8x128xf32>
    %cst_30 = arith.constant 2.000000e-01 : f32
    %39 = vector.broadcast %cst_30 : f32 to vector<8x128xf32>
    %40 = arith.mulf %39, %36 : vector<8x128xf32>
    %41 = arith.select %38, %36, %40 : vector<8x128xi1>, vector<8x128xf32>
    %c0_31 = arith.constant 0 : index
    %c0_32 = arith.constant 0 : index
    %42 = vector.load %arg9[%c0_31, %c0_32] : memref<8x128xf32, #tpu.memory_space<vmem>>, vector<8x128xf32>
    tpu.vector_store %arg9[%c0_31, %c0_32], %41 {strides = array<i32>} : memref<8x128xf32, #tpu.memory_space<vmem>>, vector<8x128xf32>,
    return
  }
}

</mosaic_0001>

<llo_original>
// kernel: tile.9
$region0: #{tile.9}
  %s0 = inlined_call_operand.vmem [shape: f32[8,12,8], index: 0, kind: input, shape index: {}]
  %s1 = inlined_call_operand.vmem [shape: f32[8,96], index: 1, kind: output, shape index: {}]
  %s2 = smov 3
  %v3 = vld [vmem:[%s0] ss:$16 sm:%s2]
  %s4 = smov 12
  %v5 = vld [vmem:[%s0] ss:$16 sm:%s4]
  %vm6 = vcmask 1043458
  %v7 = vsel %vm6, %v5, %v3
  %s8 = smov 48
  %v9 = vld [vmem:[%s0] ss:$16 sm:%s8]
  %vm10 = vcmask 1045508
  %v11 = vsel %vm10, %v9, %v7
  %s12 = smov 192
  %v13 = vld [vmem:[%s0] ss:$16 sm:%s12]
  %vm14 = vcmask 1047558
  %v15 = vsel %vm14, %v13, %v11
  %vm16 = vcmask 64512
  %17 = vst.msk [vmem:[%s1] sm:$0xff] %vm16, %v15
  %s18 = scalar_lea.vmem %s0, 11
  %s19 = smov 3
  %v20 = vld [vmem:[%s18] ss:$16 sm:%s19]
  %s21 = scalar_lea.vmem %s0, 11
  %s22 = smov 12
  %v23 = vld [vmem:[%s21] ss:$16 sm:%s22]
  %vm24 = vcmask 1043458
  %v25 = vsel %vm24, %v23, %v20
  %s26 = scalar_lea.vmem %s0, 11
  %s27 = smov 48
  %v28 = vld [vmem:[%s26] ss:$16 sm:%s27]
  %vm29 = vcmask 1045508
  %v30 = vsel %vm29, %v28, %v25
  %s31 = scalar_lea.vmem %s0, 11
  %s32 = smov 192
  %v33 = vld [vmem:[%s31] ss:$16 sm:%s32]
  %vm34 = vcmask 1047558
  %v35 = vsel %vm34, %v33, %v30
  %36 = vrot.lane.b32.xlu0 %v35, 88
  %v37 = vpop.permute.xlu0 %36
  %vm38 = vcmask 786112
  %39 = vst.msk [vmem:[%s1] sm:$0xff] %vm38, %v37
  %s40 = scalar_lea.vmem %s0, 10
  %s41 = smov 3
  %v42 = vld [vmem:[%s40] ss:$16 sm:%s41]
  %s43 = scalar_lea.vmem %s0, 10
  %s44 = smov 12
  %v45 = vld [vmem:[%s43] ss:$16 sm:%s44]
  %vm46 = vcmask 1043458
  %v47 = vsel %vm46, %v45, %v42
  %s48 = scalar_lea.vmem %s0, 10
  %s49 = smov 48
  %v50 = vld [vmem:[%s48] ss:$16 sm:%s49]
  %vm51 = vcmask 1045508
  %v52 = vsel %vm51, %v50, %v47
  %s53 = scalar_lea.vmem %s0, 10
  %s54 = smov 192
  %v55 = vld [vmem:[%s53] ss:$16 sm:%s54]
  %vm56 = vcmask 1047558
  %v57 = vsel %vm56, %v55, %v52
  %58 = vrot.lane.b32.xlu0 %v57, 80
  %v59 = vpop.permute.xlu0 %58
  %vm60 = vcmask 720512
  %61 = vst.msk [vmem:[%s1] sm:$0xff] %vm60, %v59
  %s62 = scalar_lea.vmem %s0, 9
  %s63 = smov 3
  %v64 = vld [vmem:[%s62] ss:$16 sm:%s63]
  %s65 = scalar_lea.vmem %s0, 9
  %s66 = smov 12
  %v67 = vld [vmem:[%s65] ss:$16 sm:%s66]
  %vm68 = vcmask 1043458
  %v69 = vsel %vm68, %v67, %v64
  %s70 = scalar_lea.vmem %s0, 9
  %s71 = smov 48
  %v72 = vld [vmem:[%s70] ss:$16 sm:%s71]
  %vm73 = vcmask 1045508
  %v74 = vsel %vm73, %v72, %v69
  %s75 = scalar_lea.vmem %s0, 9
  %s76 = smov 192
  %v77 = vld [vmem:[%s75] ss:$16 sm:%s76]
  %vm78 = vcmask 1047558
  %v79 = vsel %vm78, %v77, %v74
  %80 = vrot.lane.b32.xlu0 %v79, 72
  %v81 = vpop.permute.xlu0 %80
  %vm82 = vcmask 654912
  %83 = vst.msk [vmem:[%s1] sm:$0xff] %vm82, %v81
  %s84 = scalar_lea.vmem %s0, 8
  %s85 = smov 3
  %v86 = vld [vmem:[%s84] ss:$16 sm:%s85]
  %s87 = scalar_lea.vmem %s0, 8
  %s88 = smov 12
  %v89 = vld [vmem:[%s87] ss:$16 sm:%s88]
  %vm90 = vcmask 1043458
  %v91 = vsel %vm90, %v89, %v86
  %s92 = scalar_lea.vmem %s0, 8
  %s93 = smov 48
  %v94 = vld [vmem:[%s92] ss:$16 sm:%s93]
  %vm95 = vcmask 1045508
  %v96 = vsel %vm95, %v94, %v91
  %s97 = scalar_lea.vmem %s0, 8
  %s98 = smov 192
  %v99 = vld [vmem:[%s97] ss:$16 sm:%s98]
  %vm100 = vcmask 1047558
  %v101 = vsel %vm100, %v99, %v96
  %102 = vrot.lane.b32.xlu0 %v101, 64
  %v103 = vpop.permute.xlu0 %102
  %vm104 = vcmask 589312
  %105 = vst.msk [vmem:[%s1] sm:$0xff] %vm104, %v103
  %s106 = scalar_lea.vmem %s0, 7
  %s107 = smov 3
  %v108 = vld [vmem:[%s106] ss:$16 sm:%s107]
  %s109 = scalar_lea.vmem %s0, 7
  %s110 = smov 12
  %v111 = vld [vmem:[%s109] ss:$16 sm:%s110]
  %vm112 = vcmask 1043458
  %v113 = vsel %vm112, %v111, %v108
  %s114 = scalar_lea.vmem %s0, 7
  %s115 = smov 48
  %v116 = vld [vmem:[%s114] ss:$16 sm:%s115]
  %vm117 = vcmask 1045508
  %v118 = vsel %vm117, %v116, %v113
  %s119 = scalar_lea.vmem %s0, 7
  %s120 = smov 192
  %v121 = vld [vmem:[%s119] ss:$16 sm:%s120]
  %vm122 = vcmask 1047558
  %v123 = vsel %vm122, %v121, %v118
  %124 = vrot.lane.b32.xlu0 %v123, 56
  %v125 = vpop.permute.xlu0 %124
  %vm126 = vcmask 523712
  %127 = vst.msk [vmem:[%s1] sm:$0xff] %vm126, %v125
  %s128 = scalar_lea.vmem %s0, 6
  %s129 = smov 3
  %v130 = vld [vmem:[%s128] ss:$16 sm:%s129]
  %s131 = scalar_lea.vmem %s0, 6
  %s132 = smov 12
  %v133 = vld [vmem:[%s131] ss:$16 sm:%s132]
  %vm134 = vcmask 1043458
  %v135 = vsel %vm134, %v133, %v130
  %s136 = scalar_lea.vmem %s0, 6
  %s137 = smov 48
  %v138 = vld [vmem:[%s136] ss:$16 sm:%s137]
  %vm139 = vcmask 1045508
  %v140 = vsel %vm139, %v138, %v135
  %s141 = scalar_lea.vmem %s0, 6
  %s142 = smov 192
  %v143 = vld [vmem:[%s141] ss:$16 sm:%s142]
  %vm144 = vcmask 1047558
  %v145 = vsel %vm144, %v143, %v140
  %146 = vrot.lane.b32.xlu0 %v145, 48
  %v147 = vpop.permute.xlu0 %146
  %vm148 = vcmask 458112
  %149 = vst.msk [vmem:[%s1] sm:$0xff] %vm148, %v147
  %s150 = scalar_lea.vmem %s0, 5
  %s151 = smov 3
  %v152 = vld [vmem:[%s150] ss:$16 sm:%s151]
  %s153 = scalar_lea.vmem %s0, 5
  %s154 = smov 12
  %v155 = vld [vmem:[%s153] ss:$16 sm:%s154]
  %vm156 = vcmask 1043458
  %v157 = vsel %vm156, %v155, %v152
  %s158 = scalar_lea.vmem %s0, 5
  %s159 = smov 48
  %v160 = vld [vmem:[%s158] ss:$16 sm:%s159]
  %vm161 = vcmask 1045508
  %v162 = vsel %vm161, %v160, %v157
  %s163 = scalar_lea.vmem %s0, 5
  %s164 = smov 192
  %v165 = vld [vmem:[%s163] ss:$16 sm:%s164]
  %vm166 = vcmask 1047558
  %v167 = vsel %vm166, %v165, %v162
  %168 = vrot.lane.b32.xlu0 %v167, 40
  %v169 = vpop.permute.xlu0 %168
  %vm170 = vcmask 392512
  %171 = vst.msk [vmem:[%s1] sm:$0xff] %vm170, %v169
  %s172 = scalar_lea.vmem %s0, 4
  %s173 = smov 3
  %v174 = vld [vmem:[%s172] ss:$16 sm:%s173]
  %s175 = scalar_lea.vmem %s0, 4
  %s176 = smov 12
  %v177 = vld [vmem:[%s175] ss:$16 sm:%s176]
  %vm178 = vcmask 1043458
  %v179 = vsel %vm178, %v177, %v174
  %s180 = scalar_lea.vmem %s0, 4
  %s181 = smov 48
  %v182 = vld [vmem:[%s180] ss:$16 sm:%s181]
  %vm183 = vcmask 1045508
  %v184 = vsel %vm183, %v182, %v179
  %s185 = scalar_lea.vmem %s0, 4
  %s186 = smov 192
  %v187 = vld [vmem:[%s185] ss:$16 sm:%s186]
  %vm188 = vcmask 1047558
  %v189 = vsel %vm188, %v187, %v184
  %190 = vrot.lane.b32.xlu0 %v189, 32
  %v191 = vpop.permute.xlu0 %190
  %vm192 = vcmask 326912
  %193 = vst.msk [vmem:[%s1] sm:$0xff] %vm192, %v191
  %s194 = scalar_lea.vmem %s0, 3
  %s195 = smov 3
  %v196 = vld [vmem:[%s194] ss:$16 sm:%s195]
  %s197 = scalar_lea.vmem %s0, 3
  %s198 = smov 12
  %v199 = vld [vmem:[%s197] ss:$16 sm:%s198]
  %vm200 = vcmask 1043458
  %v201 = vsel %vm200, %v199, %v196
  %s202 = scalar_lea.vmem %s0, 3
  %s203 = smov 48
  %v204 = vld [vmem:[%s202] ss:$16 sm:%s203]
  %vm205 = vcmask 1045508
  %v206 = vsel %vm205, %v204, %v201
  %s207 = scalar_lea.vmem %s0, 3
  %s208 = smov 192
  %v209 = vld [vmem:[%s207] ss:$16 sm:%s208]
  %vm210 = vcmask 1047558
  %v211 = vsel %vm210, %v209, %v206
  %212 = vrot.lane.b32.xlu0 %v211, 24
  %v213 = vpop.permute.xlu0 %212
  %vm214 = vcmask 261312
  %215 = vst.msk [vmem:[%s1] sm:$0xff] %vm214, %v213
  %s216 = scalar_lea.vmem %s0, 2
  %s217 = smov 3
  %v218 = vld [vmem:[%s216] ss:$16 sm:%s217]
  %s219 = scalar_lea.vmem %s0, 2
  %s220 = smov 12
  %v221 = vld [vmem:[%s219] ss:$16 sm:%s220]
  %vm222 = vcmask 1043458
  %v223 = vsel %vm222, %v221, %v218
  %s224 = scalar_lea.vmem %s0, 2
  %s225 = smov 48
  %v226 = vld [vmem:[%s224] ss:$16 sm:%s225]
  %vm227 = vcmask 1045508
  %v228 = vsel %vm227, %v226, %v223
  %s229 = scalar_lea.vmem %s0, 2
  %s230 = smov 192
  %v231 = vld [vmem:[%s229] ss:$16 sm:%s230]
  %vm232 = vcmask 1047558
  %v233 = vsel %vm232, %v231, %v228
  %234 = vrot.lane.b32.xlu0 %v233, 16
  %v235 = vpop.permute.xlu0 %234
  %vm236 = vcmask 195712
  %237 = vst.msk [vmem:[%s1] sm:$0xff] %vm236, %v235
  %s238 = scalar_lea.vmem %s0, 1
  %s239 = smov 3
  %v240 = vld [vmem:[%s238] ss:$16 sm:%s239]
  %s241 = scalar_lea.vmem %s0, 1
  %s242 = smov 12
  %v243 = vld [vmem:[%s241] ss:$16 sm:%s242]
  %vm244 = vcmask 1043458
  %v245 = vsel %vm244, %v243, %v240
  %s246 = scalar_lea.vmem %s0, 1
  %s247 = smov 48
  %v248 = vld [vmem:[%s246] ss:$16 sm:%s247]
  %vm249 = vcmask 1045508
  %v250 = vsel %vm249, %v248, %v245
  %s251 = scalar_lea.vmem %s0, 1
  %s252 = smov 192
  %v253 = vld [vmem:[%s251] ss:$16 sm:%s252]
  %vm254 = vcmask 1047558
  %v255 = vsel %vm254, %v253, %v250
  %256 = vrot.lane.b32.xlu0 %v255, 8
  %v257 = vpop.permute.xlu0 %256
  %vm258 = vcmask 130112
  %259 = vst.msk [vmem:[%s1] sm:$0xff] %vm258, %v257

// kernel: gat_forward.1
$region0: #{gat_forward.1}
  #allocation0 [shape = 'u32[]', space=smem, size = 0x4, offset = 0x4, fixed_abs, tag = 'smem constant byte address 0x4 - core index']
  #allocation1 [shape = 'u32[72,128]{1,0:T(1,128)}', space=vmem, size = 0x9000, scoped, tag = 'internal scratch']
  %s0 = inlined_call_operand.vmem [shape: f32[8,48], index: 0, kind: input, shape index: {}]
  %s1 = inlined_call_operand.vmem [shape: f32[96,48], index: 1, kind: input, shape index: {}]
  %s2 = inlined_call_operand.vmem [shape: f32[48,96], index: 2, kind: input, shape index: {}]
  %s3 = inlined_call_operand.vmem [shape: f32[8,96], index: 3, kind: input, shape index: {}]
  %s4 = inlined_call_operand.vmem [shape: f32[48,96], index: 4, kind: input, shape index: {}]
  %s5 = inlined_call_operand.vmem [shape: f32[8,48], index: 5, kind: input, shape index: {}]
  %s6 = inlined_call_operand.vmem [shape: f32[48,96], index: 6, kind: input, shape index: {}]
  %s7 = inlined_call_operand.vmem [shape: f32[96,96], index: 7, kind: input, shape index: {}]
  %s8 = inlined_call_operand.vmem [shape: f32[96,128], index: 8, kind: input, shape index: {}]
  %s9 = inlined_call_operand.vmem [shape: f32[8,128], index: 9, kind: output, shape index: {}]
  %s10 = sld [smem:[#allocation0]]
  $region46: #{gat_forward.1} parent=0
    _
  %s12 = ssub.s32 1, %s10
  %s13 = scalar_select 0, %s12, %s10
  // Predicated region
  $region2: #{gat_forward.1} parent=0 // pred_check
    _
  $region3: #{gat_forward.1} parent=0 // pred_check_branch
    %15 = sbr.rel (0) target = $region5
  $region4: #{gat_forward.1} parent=0 // pred_region
    _
  $region5: #{gat_forward.1} parent=0 // pred_fallthru
    _
  // Predicated region
  $region6: #{gat_forward.1} parent=0 // pred_check
    _
  $region7: #{gat_forward.1} parent=0 // pred_check_branch
    %17 = sbr.rel (0) target = $region9
  $region8: #{gat_forward.1} parent=0 // pred_region
    _
  $region9: #{gat_forward.1} parent=0 // pred_fallthru
    _
  // Predicated region
  $region10: #{gat_forward.1} parent=0 // pred_check
    _
  $region11: #{gat_forward.1} parent=0 // pred_check_branch
    %19 = sbr.rel (0) target = $region13
  $region12: #{gat_forward.1} parent=0 // pred_region
    _
  $region13: #{gat_forward.1} parent=0 // pred_fallthru
    _
  // Predicated region
  $region14: #{gat_forward.1} parent=0 // pred_check
    _
  $region15: #{gat_forward.1} parent=0 // pred_check_branch
    %21 = sbr.rel (0) target = $region17
  $region16: #{gat_forward.1} parent=0 // pred_region
    _
  $region17: #{gat_forward.1} parent=0 // pred_fallthru
    _
  // Predicated region
  $region18: #{gat_forward.1} parent=0 // pred_check
    _
  $region19: #{gat_forward.1} parent=0 // pred_check_branch
    %23 = sbr.rel (0) target = $region21
  $region20: #{gat_forward.1} parent=0 // pred_region
    _
  $region21: #{gat_forward.1} parent=0 // pred_fallthru
    _
  // Predicated region
  $region22: #{gat_forward.1} parent=0 // pred_check
    _
  $region23: #{gat_forward.1} parent=0 // pred_check_branch
    %25 = sbr.rel (0) target = $region25
  $region24: #{gat_forward.1} parent=0 // pred_region
    _
  $region25: #{gat_forward.1} parent=0 // pred_fallthru
    _
  // Predicated region
  $region26: #{gat_forward.1} parent=0 // pred_check
    _
  $region27: #{gat_forward.1} parent=0 // pred_check_branch
    %27 = sbr.rel (0) target = $region29
  $region28: #{gat_forward.1} parent=0 // pred_region
    _
  $region29: #{gat_forward.1} parent=0 // pred_fallthru
    _
  // Predicated region
  $region30: #{gat_forward.1} parent=0 // pred_check
    _
  $region31: #{gat_forward.1} parent=0 // pred_check_branch
    %29 = sbr.rel (0) target = $region33
  $region32: #{gat_forward.1} parent=0 // pred_region
    _
  $region33: #{gat_forward.1} parent=0 // pred_fallthru
    _
  // Predicated region
  $region34: #{gat_forward.1} parent=0 // pred_check
    _
  $region35: #{gat_forward.1} parent=0 // pred_check_branch
    %31 = sbr.rel (0) target = $region37
  $region36: #{gat_forward.1} parent=0 // pred_region
    _
  $region37: #{gat_forward.1} parent=0 // pred_fallthru
    _
  %v32 = vld [vmem:[%s0] sm:$0xff]
  %v33 = vld [vmem:[%s4] sm:$0xff]
  %v34 = vld [vmem:[%s4 + $0x8] sm:$0xff]
  %v35 = vld [vmem:[%s4 + $0x10] sm:$0xff]
  %v36 = vld [vmem:[%s4 + $0x18] sm:$0xff]
  %v37 = vld [vmem:[%s4 + $0x20] sm:$0xff]
  %v38 = vld [vmem:[%s4 + $0x28] sm:$0xff]
  %v39 = vld [vmem:[%s5] sm:$0xff]
  %v40 = vld [vmem:[%s2] sm:$0xff]
  %v41 = vld [vmem:[%s2 + $0x8] sm:$0xff]
  %v42 = vld [vmem:[%s2 + $0x10] sm:$0xff]
  %v43 = vld [vmem:[%s2 + $0x18] sm:$0xff]
  %v44 = vld [vmem:[%s2 + $0x20] sm:$0xff]
  %v45 = vld [vmem:[%s2 + $0x28] sm:$0xff]
  %vm46 = vcmask 392192
  %v48 = vsel %vm46, %v39, 0
  %50 = vmatpush.msra.mxu0 0.0
  %51 = vmatpush.msra.mxu0 0.0
  %52 = vmatpush.msra.mxu0 0.0
  %53 = vmatpush.msra.mxu0 0.0
  %54 = vmatpush.msra.mxu0 0.0
  %55 = vmatpush.msra.mxu0 0.0
  %56 = vmatpush.msra.mxu0 0.0
  %57 = vmatpush.msra.mxu0 0.0
  %58 = vmatpush.msra.mxu0 0.0
  %59 = vmatpush.msra.mxu0 0.0
  %60 = vmatpush.msra.mxu0 %v45
  %61 = vmatpush.msra.mxu0 %v44
  %62 = vmatpush.msra.mxu0 %v43
  %63 = vmatpush.msra.mxu0 %v42
  %64 = vmatpush.msra.mxu0 %v41
  %65 = vmatpush.msra.mxu0 %v40
  %66 = vmatmul.f32.gmra.mxu0 %v48
  %v67 = vpop.f32.mrf.mxu0
  %v68 = vadd.f32 0.0, %v67
  %69 = vdwg.mxu0
  %v71 = vsel %vm46, %v32, 0
  %73 = vmatpush.msra.mxu0 0.0
  %74 = vmatpush.msra.mxu0 0.0
  %75 = vmatpush.msra.mxu0 0.0
  %76 = vmatpush.msra.mxu0 0.0
  %77 = vmatpush.msra.mxu0 0.0
  %78 = vmatpush.msra.mxu0 0.0
  %79 = vmatpush.msra.mxu0 0.0
  %80 = vmatpush.msra.mxu0 0.0
  %81 = vmatpush.msra.mxu0 0.0
  %82 = vmatpush.msra.mxu0 0.0
  %83 = vmatpush.msra.mxu0 %v38
  %84 = vmatpush.msra.mxu0 %v37
  %85 = vmatpush.msra.mxu0 %v36
  %86 = vmatpush.msra.mxu0 %v35
  %87 = vmatpush.msra.mxu0 %v34
  %88 = vmatpush.msra.mxu0 %v33
  %89 = vmatmul.f32.gmra.mxu0 %v71
  %v90 = vpop.f32.mrf.mxu0
  %v91 = vadd.f32 %v68, %v90
  %92 = vdwg.mxu0
  %vm93 = vcmp.gt.f32.partialorder %v91, 0.0
  %v94 = vmul.f32 %v91, 0.2
  %v95 = vsel %vm93, %v91, %v94
  %v96 = vld [vmem:[%s3] sm:$0xff]
  %vm97 = vcmp.gt.f32.partialorder %v96, 0.0
  %v98 = vsel %vm97, %v95, -9e+15
  %vm99 = vcmask 785408
  %v100 = vsel %vm99, %v98, -inf
  %101 = vmax.xlane.f32.xlu0 %v100
  %v102 = vpop.xlane.xlu0 %101
  %v103 = vsub.f32 %v98, %v102
  %v104 = vmul.f32 %v103, 1.442695
  %v105 = vpow.pop %v104
  %v106 = vld [vmem:[%s1] sm:$0xff]
  %v107 = vld [vmem:[%s1 + $0x8] sm:$0xff]
  %v108 = vld [vmem:[%s1 + $0x10] sm:$0xff]
  %v109 = vld [vmem:[%s1 + $0x18] sm:$0xff]
  %v110 = vld [vmem:[%s1 + $0x20] sm:$0xff]
  %v111 = vld [vmem:[%s1 + $0x28] sm:$0xff]
  %v112 = vld [vmem:[%s1 + $0x30] sm:$0xff]
  %v113 = vld [vmem:[%s1 + $0x38] sm:$0xff]
  %v114 = vld [vmem:[%s1 + $0x40] sm:$0xff]
  %v115 = vld [vmem:[%s1 + $0x48] sm:$0xff]
  %v116 = vld [vmem:[%s1 + $0x50] sm:$0xff]
  %v117 = vld [vmem:[%s1 + $0x58] sm:$0xff]
  %v119 = vsel %vm99, %v105, 0
  %121 = vmatpush.msra.mxu0 0.0
  %122 = vmatpush.msra.mxu0 0.0
  %123 = vmatpush.msra.mxu0 0.0
  %124 = vmatpush.msra.mxu0 0.0
  %125 = vmatpush.msra.mxu0 %v117
  %126 = vmatpush.msra.mxu0 %v116
  %127 = vmatpush.msra.mxu0 %v115
  %128 = vmatpush.msra.mxu0 %v114
  %129 = vmatpush.msra.mxu0 %v113
  %130 = vmatpush.msra.mxu0 %v112
  %131 = vmatpush.msra.mxu0 %v111
  %132 = vmatpush.msra.mxu0 %v110
  %133 = vmatpush.msra.mxu0 %v109
  %134 = vmatpush.msra.mxu0 %v108
  %135 = vmatpush.msra.mxu0 %v107
  %136 = vmatpush.msra.mxu0 %v106
  %137 = vmatmul.f32.gmra.mxu0 %v119
  %v138 = vpop.f32.mrf.mxu0
  %v139 = vadd.f32 0.0, %v138
  %140 = vdwg.mxu0
  %v141 = vld [vmem:[%s6] sm:$0xff]
  %v142 = vld [vmem:[%s6 + $0x8] sm:$0xff]
  %v143 = vld [vmem:[%s6 + $0x10] sm:$0xff]
  %v144 = vld [vmem:[%s6 + $0x18] sm:$0xff]
  %v145 = vld [vmem:[%s6 + $0x20] sm:$0xff]
  %v146 = vld [vmem:[%s6 + $0x28] sm:$0xff]
  %v148 = vsel %vm46, %v139, 0
  %150 = vmatpush.msra.mxu0 0.0
  %151 = vmatpush.msra.mxu0 0.0
  %152 = vmatpush.msra.mxu0 0.0
  %153 = vmatpush.msra.mxu0 0.0
  %154 = vmatpush.msra.mxu0 0.0
  %155 = vmatpush.msra.mxu0 0.0
  %156 = vmatpush.msra.mxu0 0.0
  %157 = vmatpush.msra.mxu0 0.0
  %158 = vmatpush.msra.mxu0 0.0
  %159 = vmatpush.msra.mxu0 0.0
  %160 = vmatpush.msra.mxu0 %v146
  %161 = vmatpush.msra.mxu0 %v145
  %162 = vmatpush.msra.mxu0 %v144
  %163 = vmatpush.msra.mxu0 %v143
  %164 = vmatpush.msra.mxu0 %v142
  %165 = vmatpush.msra.mxu0 %v141
  %166 = vmatmul.f32.gmra.mxu0 %v148
  %v167 = vpop.f32.mrf.mxu0
  %v168 = vadd.f32 0.0, %v167
  %169 = vdwg.mxu0
  %v170 = vld [vmem:[%s7] sm:$0xff]
  %v171 = vld [vmem:[%s7 + $0x8] sm:$0xff]
  %v172 = vld [vmem:[%s7 + $0x10] sm:$0xff]
  %v173 = vld [vmem:[%s7 + $0x18] sm:$0xff]
  %v174 = vld [vmem:[%s7 + $0x20] sm:$0xff]
  %v175 = vld [vmem:[%s7 + $0x28] sm:$0xff]
  %v176 = vld [vmem:[%s7 + $0x30] sm:$0xff]
  %v177 = vld [vmem:[%s7 + $0x38] sm:$0xff]
  %v178 = vld [vmem:[%s7 + $0x40] sm:$0xff]
  %v179 = vld [vmem:[%s7 + $0x48] sm:$0xff]
  %v180 = vld [vmem:[%s7 + $0x50] sm:$0xff]
  %v181 = vld [vmem:[%s7 + $0x58] sm:$0xff]
  %182 = vmatpush.msra.mxu0 0.0
  %183 = vmatpush.msra.mxu0 0.0
  %184 = vmatpush.msra.mxu0 0.0
  %185 = vmatpush.msra.mxu0 0.0
  %186 = vmatpush.msra.mxu0 %v181
  %187 = vmatpush.msra.mxu0 %v180
  %188 = vmatpush.msra.mxu0 %v179
  %189 = vmatpush.msra.mxu0 %v178
  %190 = vmatpush.msra.mxu0 %v177
  %191 = vmatpush.msra.mxu0 %v176
  %192 = vmatpush.msra.mxu0 %v175
  %193 = vmatpush.msra.mxu0 %v174
  %194 = vmatpush.msra.mxu0 %v173
  %195 = vmatpush.msra.mxu0 %v172
  %196 = vmatpush.msra.mxu0 %v171
  %197 = vmatpush.msra.mxu0 %v170
  %198 = vmatmul.f32.gmra.mxu0 %v119
  %v199 = vpop.f32.mrf.mxu0
  %v200 = vadd.f32 0.0, %v199
  %201 = vdwg.mxu0
  %v202 = vrcp.pop %v200
  %v203 = vmul.f32 %v200, %v202
  %v204 = vsub.f32 1.0, %v203
  %v205 = vmul.f32 %v202, %v204
  %v206 = vadd.f32 %v202, %v205
  %vm207 = vweird.f32 %v200
  %vm208 = vweird.f32 %v202
  %vm209 = vmor %vm207, %vm208
  %v210 = vsel %vm209, %v202, %v206
  %v211 = vand.u32 2147483647, %v200
  %vm212 = vcmp.eq.f32.partialorder %v211, 8.507059e+37
  %v213 = vand.u32 %v200, 2147483648
  %v214 = vor.u32 1.1754944e-38, %v213
  %v215 = vsel %vm212, %v214, %v210
  %v216 = vmul.f32 %v168, %v215
  %vm217 = vcmp.gt.f32.partialorder %v216, 0.0
  %v218 = vmul.f32 %v216, 1.442695
  %v219 = vpow.pop %v218
  %v220 = vsub.f32 %v219, 1.0
  %v221 = vsel %vm217, %v216, %v220
  %v222 = vld [vmem:[%s8] sm:$0xff]
  %v223 = vld [vmem:[%s8 + $0x8] sm:$0xff]
  %v224 = vld [vmem:[%s8 + $0x10] sm:$0xff]
  %v225 = vld [vmem:[%s8 + $0x18] sm:$0xff]
  %v226 = vld [vmem:[%s8 + $0x20] sm:$0xff]
  %v227 = vld [vmem:[%s8 + $0x28] sm:$0xff]
  %v228 = vld [vmem:[%s8 + $0x30] sm:$0xff]
  %v229 = vld [vmem:[%s8 + $0x38] sm:$0xff]
  %v230 = vld [vmem:[%s8 + $0x40] sm:$0xff]
  %v231 = vld [vmem:[%s8 + $0x48] sm:$0xff]
  %v232 = vld [vmem:[%s8 + $0x50] sm:$0xff]
  %v233 = vld [vmem:[%s8 + $0x58] sm:$0xff]
  %v235 = vsel %vm99, %v221, 0
  %237 = vmatpush.msra.mxu0 0.0
  %238 = vmatpush.msra.mxu0 0.0
  %239 = vmatpush.msra.mxu0 0.0
  %240 = vmatpush.msra.mxu0 0.0
  %241 = vmatpush.msra.mxu0 %v233
  %242 = vmatpush.msra.mxu0 %v232
  %243 = vmatpush.msra.mxu0 %v231
  %244 = vmatpush.msra.mxu0 %v230
  %245 = vmatpush.msra.mxu0 %v229
  %246 = vmatpush.msra.mxu0 %v228
  %247 = vmatpush.msra.mxu0 %v227
  %248 = vmatpush.msra.mxu0 %v226
  %249 = vmatpush.msra.mxu0 %v225
  %250 = vmatpush.msra.mxu0 %v224
  %251 = vmatpush.msra.mxu0 %v223
  %252 = vmatpush.msra.mxu0 %v222
  %253 = vmatmul.f32.gmra.mxu0 %v235
  %v254 = vpop.f32.mrf.mxu0
  %v255 = vadd.f32 0.0, %v254
  %256 = vdwg.mxu0
  %vm257 = vcmp.gt.f32.partialorder %v255, 0.0
  %v258 = vmul.f32 %v255, 0.2
  %v259 = vsel %vm257, %v255, %v258
  %260 = vst [vmem:[%s9] sm:$0xff] %v259
  // Predicated region
  $region38: #{gat_forward.1} parent=0 // pred_check
    _
  $region39: #{gat_forward.1} parent=0 // pred_check_branch
    %262 = sbr.rel (0) target = $region41
  $region40: #{gat_forward.1} parent=0 // pred_region
    _
  $region41: #{gat_forward.1} parent=0 // pred_fallthru
    _
  // Predicated region
  $region42: #{gat_forward.1} parent=0 // pred_check
    _
  $region43: #{gat_forward.1} parent=0 // pred_check_branch
    %264 = sbr.rel (0) target = $region45
  $region44: #{gat_forward.1} parent=0 // pred_region
    _
  $region45: #{gat_forward.1} parent=0 // pred_fallthru
    _

</llo_original>
